<compile_context>
chip_gen: v7x
topology: tpu7x:2x2x1
jax: 0.10.0
libtpu: 0.0.40
codegen_flags: <defaults>
</compile_context>

<pallas_src>
import math
import functools

import jax
import jax.numpy as jnp
from jax.experimental import pallas as pl
from jax.experimental.pallas import tpu as pltpu


_NEG_BIG = -1e30  # acts as -inf without inf-inf NaN risk in the online max


def _arcface_kernel(emb_ref, wt_ref, bias_ref, lbl_ref, out_ref,
                    m_scr, l_scr, t_scr,
                    *, cos_m, sin_m, th, mm, scale, inv_scale):
    kc = pl.program_id(1)
    nc = pl.num_programs(1)

    # ---- once per batch tile: reset the online-LSE accumulators ------------
    @pl.when(kc == 0)
    def _init():
        m_scr[...] = jnp.full(m_scr.shape, _NEG_BIG, m_scr.dtype)
        l_scr[...] = jnp.zeros(l_scr.shape, l_scr.dtype)
        t_scr[...] = jnp.zeros(t_scr.shape, t_scr.dtype)

    # ---- scaled cosine for this class tile: (tB, E) @ (E, tC) on the MXU ---
    # Embeddings arrive L2-normalized; W^T arrives L2-normalized and
    # pre-scaled by s, so s_cos == s * cos(theta) with no per-element fixup.
    s_cos = jnp.dot(emb_ref[...], wt_ref[...],
                    preferred_element_type=jnp.float32)

    tb, tc = s_cos.shape
    local_lbl = lbl_ref[...] - kc * tc                       # (tB, 1) int32
    col = jax.lax.broadcasted_iota(jnp.int32, (tb, tc), 1)
    is_target = col == local_lbl                             # (tB, tC)

    # ---- ArcFace margin only on the target column (O(tB) work) -------------
    s_cos_t = jnp.sum(jnp.where(is_target, s_cos, 0.0), axis=1, keepdims=True)
    cos_t = s_cos_t * inv_scale
    sin_t = jnp.sqrt(jnp.clip(1.0 - cos_t * cos_t, 0.0, 1.0))
    phi_t = cos_t * cos_m - sin_t * sin_m
    phi_t = jnp.where(cos_t > th, phi_t, cos_t - mm)
    s_phi_t = phi_t * scale
    in_tile = jnp.logical_and(local_lbl >= 0, local_lbl < tc)   # (tB, 1)
    t_scr[...] += jnp.where(in_tile, s_phi_t, 0.0)

    # Swap in the margin logit on the target column; padded classes are masked
    # with an additive (1, tC) bias (0 / -1e30) — cheaper than compare+select.
    logits = jnp.where(is_target, s_phi_t, s_cos) + bias_ref[...]

    # ---- online logsumexp over class tiles ---------------------------------
    m_prev = m_scr[...]
    m_new = jnp.maximum(m_prev, jnp.max(logits, axis=1, keepdims=True))
    alpha = jnp.exp(m_prev - m_new)
    l_scr[...] = alpha * l_scr[...] + jnp.sum(jnp.exp(logits - m_new),
                                              axis=1, keepdims=True)
    m_scr[...] = m_new

    # ---- finalize: per-row cross entropy (written once per batch tile) -----
    @pl.when(kc == nc - 1)
    def _fin():
        out_ref[...] = m_scr[...] + jnp.log(l_scr[...]) - t_scr[...]


def _ceil_to(x, m):
    return -(-x // m) * m


def _cdiv(a, b):
    return -(-a // b)


def arcface_loss(embeddings, W, labels, *, margin=0.5, scale=64.0,
                 tile_b=None, tile_c=None, mxu_dtype=jnp.bfloat16,
                 num_batch_shards=1, w_buffers=2,
                 vmem_budget_bytes=None, vmem_limit_bytes=None):
    """ArcFace loss forward (mean cross entropy) as a Pallas TPU kernel.

    mxu_dtype=bf16 is recommended on every generation (v5e included — it is
    the most HBM-bound); use jnp.float32 for bit-tight comparisons.
    num_batch_shards: set to 2 on v7x so the "parallel" batch axis is split
    across its two TensorCores; 1 (default) minimizes W re-streaming on
    v5e/v6e. w_buffers > 2 enables pl.Buffered deeper pipelining on W^T.
    Note: out-of-range labels (>= num_classes) silently get a zero target
    logit, same as the one-hot reference.
    """
    B, E = embeddings.shape
    C, E_w = W.shape
    assert E == E_w
    assert labels.shape == (B,)

    cos_m = math.cos(margin)
    sin_m = math.sin(margin)
    th = math.cos(math.pi - margin)
    mm = math.sin(math.pi - margin) * margin

    w_bytes = jnp.dtype(mxu_dtype).itemsize
    e_pad = _ceil_to(E, 128)

    # ---- VMEM capacity / budget (v7x: 64 MiB per core; v5e/v6e: 128 MiB) ---
    try:
        cap = int(pltpu.get_tpu_info().vmem_capacity_bytes)
    except Exception:
        cap = 64 * 1024 * 1024                      # v7x-safe assumption
    if vmem_budget_bytes is None:
        vmem_budget_bytes = int(cap * 0.40)

    # ---- class tile: cap at 512 so (tB, tC) f32 temporaries don't spill ----
    c_pad128 = _ceil_to(C, 128)
    if tile_c is None:
        tile_c = min(512, c_pad128)
    tile_c = min(_ceil_to(tile_c, 128), c_pad128)
    c_pad = _ceil_to(C, tile_c)
    nc = c_pad // tile_c

    n_w_buf = max(int(w_buffers), 2)

    # ---- batch tile: as large as VMEM allows, so W^T streams from HBM once
    #      per batch shard (the kernel is W-bandwidth bound at small tile_b).
    if tile_b is None:
        target_tb = _ceil_to(_cdiv(B, max(int(num_batch_shards), 1)), 8)
        w_buf_bytes = n_w_buf * e_pad * tile_c * w_bytes
        per_row = (2 * e_pad * w_bytes        # embedding block (double-buffered)
                   + 6 * tile_c * 4           # f32 body temporaries
                   + 64)                      # labels / out / m / l / t
        avail = vmem_budget_bytes - w_buf_bytes - (1 << 20)
        max_tb = max(avail // per_row, 8)
        if target_tb <= max_tb:
            tile_b = int(target_tb)
        elif max_tb >= 256:
            tile_b = int((max_tb // 256) * 256)   # fill the 256-wide MXU
        else:
            tile_b = int((max_tb // 8) * 8)
    tile_b = max(_ceil_to(min(int(tile_b), _ceil_to(B, 8)), 8), 8)
    b_pad = _ceil_to(max(B, 1), tile_b)
    nb = b_pad // tile_b

    # ---- padded / pre-laid-out operands (one-time, outside the hot loop) ---
    f32 = jnp.float32
    eps = 1e-12
    emb_f32 = embeddings.astype(f32)
    emb_n = emb_f32 / jnp.maximum(
        jnp.linalg.norm(emb_f32, axis=1, keepdims=True), eps)
    emb_p = jnp.pad(emb_n, ((0, b_pad - B), (0, e_pad - E))).astype(mxu_dtype)

    w_f32 = W.astype(f32)
    w_n = w_f32 / jnp.maximum(jnp.linalg.norm(w_f32, axis=1, keepdims=True), eps)
    # Transposed to (E, C), L2-normalized, pre-scaled by s, cast to MXU dtype.
    wt_p = jnp.pad((w_n * scale).T,
                   ((0, e_pad - E), (0, c_pad - C))).astype(mxu_dtype)

    # Additive padding mask: 0 for real classes, -1e30 for padded columns.
    bias_p = jnp.where(jnp.arange(c_pad) < C, 0.0, _NEG_BIG
                       ).astype(f32).reshape(1, c_pad)
    lbl_p = jnp.pad(labels.astype(jnp.int32), (0, b_pad - B)).reshape(b_pad, 1)

    kernel = functools.partial(
        _arcface_kernel, cos_m=cos_m, sin_m=sin_m, th=th, mm=mm,
        scale=float(scale), inv_scale=1.0 / float(scale))

    vmem_need = (2 * tile_b * e_pad * w_bytes        # emb blocks
                 + n_w_buf * e_pad * tile_c * w_bytes  # W^T blocks
                 + 2 * tile_c * 4                    # bias blocks
                 + 4 * tile_b * 4                    # labels + out blocks
                 + 3 * tile_b * 4                    # m / l / t scratch
                 + 6 * tile_b * tile_c * 4)          # body temporaries
    if vmem_limit_bytes is None:
        vmem_limit_bytes = int(min(max(2 * vmem_need, 32 * 1024 * 1024),
                                   int(cap * 0.75)))

    if n_w_buf > 2:
        w_spec = pl.BlockSpec((e_pad, tile_c), lambda i, j: (0, j),
                              pipeline_mode=pl.Buffered(n_w_buf))
    else:
        w_spec = pl.BlockSpec((e_pad, tile_c), lambda i, j: (0, j))

    per_row = pl.pallas_call(
        kernel,
        out_shape=jax.ShapeDtypeStruct((b_pad, 1), jnp.float32),
        grid_spec=pltpu.PrefetchScalarGridSpec(
            num_scalar_prefetch=0,
            grid=(nb, nc),
            in_specs=[
                pl.BlockSpec((tile_b, e_pad), lambda i, j: (i, 0)),  # normed emb
                w_spec,                                              # s * W_hat^T
                pl.BlockSpec((1, tile_c), lambda i, j: (0, j)),      # pad bias
                pl.BlockSpec((tile_b, 1), lambda i, j: (i, 0)),      # labels
            ],
            out_specs=pl.BlockSpec((tile_b, 1), lambda i, j: (i, 0)),
            scratch_shapes=[
                pltpu.VMEM((tile_b, 1), jnp.float32),  # running max
                pltpu.VMEM((tile_b, 1), jnp.float32),  # running sum-exp
                pltpu.VMEM((tile_b, 1), jnp.float32),  # scaled target logit
            ]),
        compiler_params=pltpu.CompilerParams(
            dimension_semantics=("parallel", "arbitrary"),
            vmem_limit_bytes=int(vmem_limit_bytes)),
    )(emb_p, wt_p, bias_p, lbl_p)

    return jnp.sum(per_row[:B, 0]) / B


def arcface_loss_ref(embeddings, W, labels, *, margin=0.5, scale=64.0):
    """Pure-JAX reference mirroring the PyTorch module."""
    cos_m, sin_m = math.cos(margin), math.sin(margin)
    th = math.cos(math.pi - margin)
    mm = math.sin(math.pi - margin) * margin
    eps = 1e-12
    e = embeddings / jnp.maximum(
        jnp.linalg.norm(embeddings, axis=1, keepdims=True), eps)
    w = W / jnp.maximum(jnp.linalg.norm(W, axis=1, keepdims=True), eps)
    cosine = e @ w.T
    sine = jnp.sqrt(jnp.clip(1.0 - cosine ** 2, 0.0, 1.0))
    phi = cosine * cos_m - sine * sin_m
    phi = jnp.where(cosine > th, phi, cosine - mm)
    one_hot = jax.nn.one_hot(labels, W.shape[0], dtype=jnp.float32)
    logits = (one_hot * phi + (1.0 - one_hot) * cosine) * scale
    logp = jax.nn.log_softmax(logits, axis=-1)
    return -jnp.mean(jnp.sum(one_hot * logp, axis=-1))


if __name__ == "__main__":
    num_classes = 16
    embedding_size = 32
    batch = 8

    key = jax.random.PRNGKey(0)
    k_emb, k_w, k_lbl = jax.random.split(key, 3)

    embeddings = jax.random.normal(k_emb, (batch, embedding_size),
                                   dtype=jnp.float32)
    labels = jax.random.randint(k_lbl, (batch,), 0, num_classes,
                                dtype=jnp.int32)
    # nn.init.xavier_uniform_ on W: U(-a, a), a = sqrt(6 / (fan_in + fan_out))
    bound = math.sqrt(6.0 / (num_classes + embedding_size))
    W = jax.random.uniform(k_w, (num_classes, embedding_size),
                           minval=-bound, maxval=bound, dtype=jnp.float32)

    ref = arcface_loss_ref(embeddings, W, labels)

    # f32 MXU path: matches the PyTorch/JAX reference tightly.
    loss_f32 = arcface_loss(embeddings, W, labels, mxu_dtype=jnp.float32)
    jax.block_until_ready(loss_f32)
    assert jnp.allclose(loss_f32, ref, rtol=1e-4, atol=1e-4), (loss_f32, ref)

    # bf16 MXU-input path (recommended default); f32 accumulation and f32
    # margin/logsumexp math keep it close, looser tolerance for bf16 rounding.
    loss_bf16 = arcface_loss(embeddings, W, labels, mxu_dtype=jnp.bfloat16)
    jax.block_until_ready(loss_bf16)
    assert jnp.allclose(loss_bf16, ref, rtol=5e-2, atol=5e-2), (loss_bf16, ref)

    print("KERNEL_OK")
</pallas_src>

<mosaic_0001>
module attributes {stable_mosaic.version = 11 : i64} {
  func.func @_arcface_kernel(%arg0: i32, %arg1: i32, %arg2: memref<8x128xf32, #tpu.memory_space<vmem>>, %arg3: memref<128x128xf32, #tpu.memory_space<vmem>>, %arg4: memref<1x128xf32, #tpu.memory_space<vmem>>, %arg5: memref<8x1xi32, #tpu.memory_space<vmem>>, %arg6: memref<8x1xf32, #tpu.memory_space<vmem>>, %arg7: memref<8x1xf32, #tpu.memory_space<vmem>>, %arg8: memref<8x1xf32, #tpu.memory_space<vmem>>, %arg9: memref<8x1xf32, #tpu.memory_space<vmem>>) attributes {dimension_semantics = [#tpu.dimension_semantics<parallel>, #tpu.dimension_semantics<arbitrary>], iteration_bounds = array<i64: 1, 1>, scalar_prefetch = 0 : i64, scratch_operands = 3 : i64, tpu.core_type = #tpu.core_type<tc>, window_params = [{transform_indices = @transform_0, window_bounds = array<i64: 8, 128>}, {transform_indices = @transform_1, window_bounds = array<i64: 128, 128>}, {transform_indices = @transform_2, window_bounds = array<i64: 1, 128>}, {transform_indices = @transform_3, window_bounds = array<i64: 8, 1>}, {transform_indices = @transform_4, window_bounds = array<i64: 8, 1>}]} {
    %c0_i32 = arith.constant 0 : i32
    %0 = arith.cmpi eq, %arg1, %c0_i32 : i32
    %1 = arith.extui %0 : i1 to i32
    %c0_i32_0 = arith.constant 0 : i32
    %2 = arith.cmpi ne, %1, %c0_i32_0 : i32
    scf.if %2 {
      %cst_38 = arith.constant -1.000000e+30 : f32
      %74 = vector.broadcast %cst_38 : f32 to vector<8x1xf32>
      %c0_39 = arith.constant 0 : index
      %c0_40 = arith.constant 0 : index
      %75 = vector.load %arg7[%c0_39, %c0_40] : memref<8x1xf32, #tpu.memory_space<vmem>>, vector<8x1xf32>
      tpu.vector_store %arg7[%c0_39, %c0_40], %74 {strides = array<i32>} : memref<8x1xf32, #tpu.memory_space<vmem>>, vector<8x1xf32>,
      %cst_41 = arith.constant 0.000000e+00 : f32
      %76 = vector.broadcast %cst_41 : f32 to vector<8x1xf32>
      %c0_42 = arith.constant 0 : index
      %c0_43 = arith.constant 0 : index
      %77 = vector.load %arg8[%c0_42, %c0_43] : memref<8x1xf32, #tpu.memory_space<vmem>>, vector<8x1xf32>
      tpu.vector_store %arg8[%c0_42, %c0_43], %76 {strides = array<i32>} : memref<8x1xf32, #tpu.memory_space<vmem>>, vector<8x1xf32>,
      %cst_44 = arith.constant 0.000000e+00 : f32
      %78 = vector.broadcast %cst_44 : f32 to vector<8x1xf32>
      %c0_45 = arith.constant 0 : index
      %c0_46 = arith.constant 0 : index
      %79 = vector.load %arg9[%c0_45, %c0_46] : memref<8x1xf32, #tpu.memory_space<vmem>>, vector<8x1xf32>
      tpu.vector_store %arg9[%c0_45, %c0_46], %78 {strides = array<i32>} : memref<8x1xf32, #tpu.memory_space<vmem>>, vector<8x1xf32>,
    } else {
    }
    %c0 = arith.constant 0 : index
    %c0_1 = arith.constant 0 : index
    %3 = vector.load %arg2[%c0, %c0_1] : memref<8x128xf32, #tpu.memory_space<vmem>>, vector<8x128xf32>
    %c0_2 = arith.constant 0 : index
    %c0_3 = arith.constant 0 : index
    %4 = vector.load %arg3[%c0_2, %c0_3] : memref<128x128xf32, #tpu.memory_space<vmem>>, vector<128x128xf32>
    %cst = arith.constant dense<0.000000e+00> : vector<8x128xf32>
    %5 = tpu.matmul %3, %4, %cst {dimension_numbers = #tpu.dot_dimension_numbers<[1], [0], [0], [1], [0, 0, 1, 1], [], []>} : vector<8x128xf32>, vector<128x128xf32>, vector<8x128xf32> -> vector<8x128xf32>
    %c0_4 = arith.constant 0 : index
    %c0_5 = arith.constant 0 : index
    %6 = vector.load %arg5[%c0_4, %c0_5] : memref<8x1xi32, #tpu.memory_space<vmem>>, vector<8x1xi32>
    %c128_i32 = arith.constant 128 : i32
    %7 = arith.muli %arg1, %c128_i32 : i32
    %8 = vector.broadcast %7 : i32 to vector<8x1xi32>
    %9 = arith.subi %6, %8 : vector<8x1xi32>
    %10 = tpu.iota {dimensions = array<i32: 1>} : vector<8x128xi32>
    %11 = vector.broadcast %9 : vector<8x1xi32> to vector<8x128xi32>
    %12 = arith.cmpi eq, %10, %11 : vector<8x128xi32>
    %cst_6 = arith.constant 0.000000e+00 : f32
    %13 = vector.broadcast %cst_6 : f32 to vector<8x128xf32>
    %14 = arith.select %12, %5, %13 : vector<8x128xi1>, vector<8x128xf32>
    %cst_7 = arith.constant dense<0.000000e+00> : vector<8xf32>
    %15 = vector.multi_reduction <add>, %14, %cst_7 [1] : vector<8x128xf32> to vector<8xf32>
    %16 = vector.shape_cast %15 : vector<8xf32> to vector<8x1xf32>
    %cst_8 = arith.constant 1.562500e-02 : f32
    %17 = vector.broadcast %cst_8 : f32 to vector<8x1xf32>
    %18 = arith.mulf %16, %17 : vector<8x1xf32>
    %19 = arith.mulf %18, %18 : vector<8x1xf32>
    %cst_9 = arith.constant 1.000000e+00 : f32
    %20 = vector.broadcast %cst_9 : f32 to vector<8x1xf32>
    %21 = arith.subf %20, %19 : vector<8x1xf32>
    %cst_10 = arith.constant 0.000000e+00 : f32
    %cst_11 = arith.constant 1.000000e+00 : f32
    %22 = vector.broadcast %cst_10 : f32 to vector<8x1xf32>
    %23 = arith.maximumf %22, %21 : vector<8x1xf32>
    %24 = vector.broadcast %cst_11 : f32 to vector<8x1xf32>
    %25 = arith.minimumf %24, %23 : vector<8x1xf32>
    %26 = math.sqrt %25 : vector<8x1xf32>
    %cst_12 = arith.constant 0.87758255 : f32
    %27 = vector.broadcast %cst_12 : f32 to vector<8x1xf32>
    %28 = arith.mulf %18, %27 : vector<8x1xf32>
    %cst_13 = arith.constant 0.47942555 : f32
    %29 = vector.broadcast %cst_13 : f32 to vector<8x1xf32>
    %30 = arith.mulf %26, %29 : vector<8x1xf32>
    %31 = arith.subf %28, %30 : vector<8x1xf32>
    %cst_14 = arith.constant -0.87758255 : f32
    %32 = vector.broadcast %cst_14 : f32 to vector<8x1xf32>
    %33 = arith.cmpf ogt, %18, %32 : vector<8x1xf32>
    %cst_15 = arith.constant 0.239712775 : f32
    %34 = vector.broadcast %cst_15 : f32 to vector<8x1xf32>
    %35 = arith.subf %18, %34 : vector<8x1xf32>
    %36 = arith.select %33, %31, %35 : vector<8x1xi1>, vector<8x1xf32>
    %cst_16 = arith.constant 6.400000e+01 : f32
    %37 = vector.broadcast %cst_16 : f32 to vector<8x1xf32>
    %38 = arith.mulf %36, %37 : vector<8x1xf32>
    %c0_i32_17 = arith.constant 0 : i32
    %39 = vector.broadcast %c0_i32_17 : i32 to vector<8x1xi32>
    %40 = arith.cmpi sge, %9, %39 : vector<8x1xi32>
    %c128_i32_18 = arith.constant 128 : i32
    %41 = vector.broadcast %c128_i32_18 : i32 to vector<8x1xi32>
    %42 = arith.cmpi slt, %9, %41 : vector<8x1xi32>
    %43 = arith.andi %40, %42 : vector<8x1xi1>
    %c0_19 = arith.constant 0 : index
    %c0_20 = arith.constant 0 : index
    %44 = vector.load %arg9[%c0_19, %c0_20] : memref<8x1xf32, #tpu.memory_space<vmem>>, vector<8x1xf32>
    %cst_21 = arith.constant 0.000000e+00 : f32
    %45 = vector.broadcast %cst_21 : f32 to vector<8x1xf32>
    %46 = arith.select %43, %38, %45 : vector<8x1xi1>, vector<8x1xf32>
    %47 = arith.addf %44, %46 : vector<8x1xf32>
    %c0_22 = arith.constant 0 : index
    %c0_23 = arith.constant 0 : index
    %48 = vector.load %arg9[%c0_22, %c0_23] : memref<8x1xf32, #tpu.memory_space<vmem>>, vector<8x1xf32>
    tpu.vector_store %arg9[%c0_22, %c0_23], %47 {strides = array<i32>} : memref<8x1xf32, #tpu.memory_space<vmem>>, vector<8x1xf32>,
    %49 = vector.shape_cast %38 : vector<8x1xf32> to vector<8x1xf32>
    %50 = vector.broadcast %49 : vector<8x1xf32> to vector<8x128xf32>
    %51 = arith.select %12, %50, %5 : vector<8x128xi1>, vector<8x128xf32>
    %c0_24 = arith.constant 0 : index
    %c0_25 = arith.constant 0 : index
    %52 = vector.load %arg4[%c0_24, %c0_25] : memref<1x128xf32, #tpu.memory_space<vmem>>, vector<1x128xf32>
    %53 = vector.broadcast %52 : vector<1x128xf32> to vector<8x128xf32>
    %54 = arith.addf %51, %53 : vector<8x128xf32>
    %c0_26 = arith.constant 0 : index
    %c0_27 = arith.constant 0 : index
    %55 = vector.load %arg7[%c0_26, %c0_27] : memref<8x1xf32, #tpu.memory_space<vmem>>, vector<8x1xf32>
    %cst_28 = arith.constant dense<0xFF800000> : vector<8xf32>
    %56 = vector.multi_reduction <maximumf>, %54, %cst_28 [1] : vector<8x128xf32> to vector<8xf32>
    %57 = vector.shape_cast %56 : vector<8xf32> to vector<8x1xf32>
    %58 = arith.maximumf %55, %57 : vector<8x1xf32>
    %59 = arith.subf %55, %58 : vector<8x1xf32>
    %60 = math.exp %59 : vector<8x1xf32>
    %c0_29 = arith.constant 0 : index
    %c0_30 = arith.constant 0 : index
    %61 = vector.load %arg8[%c0_29, %c0_30] : memref<8x1xf32, #tpu.memory_space<vmem>>, vector<8x1xf32>
    %62 = arith.mulf %60, %61 : vector<8x1xf32>
    %63 = vector.broadcast %58 : vector<8x1xf32> to vector<8x128xf32>
    %64 = arith.subf %54, %63 : vector<8x128xf32>
    %65 = math.exp %64 : vector<8x128xf32>
    %cst_31 = arith.constant dense<0.000000e+00> : vector<8xf32>
    %66 = vector.multi_reduction <add>, %65, %cst_31 [1] : vector<8x128xf32> to vector<8xf32>
    %67 = vector.shape_cast %66 : vector<8xf32> to vector<8x1xf32>
    %68 = arith.addf %62, %67 : vector<8x1xf32>
    %c0_32 = arith.constant 0 : index
    %c0_33 = arith.constant 0 : index
    %69 = vector.load %arg8[%c0_32, %c0_33] : memref<8x1xf32, #tpu.memory_space<vmem>>, vector<8x1xf32>
    tpu.vector_store %arg8[%c0_32, %c0_33], %68 {strides = array<i32>} : memref<8x1xf32, #tpu.memory_space<vmem>>, vector<8x1xf32>,
    %c0_34 = arith.constant 0 : index
    %c0_35 = arith.constant 0 : index
    %70 = vector.load %arg7[%c0_34, %c0_35] : memref<8x1xf32, #tpu.memory_space<vmem>>, vector<8x1xf32>
    tpu.vector_store %arg7[%c0_34, %c0_35], %58 {strides = array<i32>} : memref<8x1xf32, #tpu.memory_space<vmem>>, vector<8x1xf32>,
    %c0_i32_36 = arith.constant 0 : i32
    %71 = arith.cmpi eq, %arg1, %c0_i32_36 : i32
    %72 = arith.extui %71 : i1 to i32
    %c0_i32_37 = arith.constant 0 : i32
    %73 = arith.cmpi ne, %72, %c0_i32_37 : i32
    scf.if %73 {
      %c0_38 = arith.constant 0 : index
      %c0_39 = arith.constant 0 : index
      %74 = vector.load %arg7[%c0_38, %c0_39] : memref<8x1xf32, #tpu.memory_space<vmem>>, vector<8x1xf32>
      %c0_40 = arith.constant 0 : index
      %c0_41 = arith.constant 0 : index
      %75 = vector.load %arg8[%c0_40, %c0_41] : memref<8x1xf32, #tpu.memory_space<vmem>>, vector<8x1xf32>
      %76 = math.log %75 : vector<8x1xf32>
      %77 = arith.addf %74, %76 : vector<8x1xf32>
      %c0_42 = arith.constant 0 : index
      %c0_43 = arith.constant 0 : index
      %78 = vector.load %arg9[%c0_42, %c0_43] : memref<8x1xf32, #tpu.memory_space<vmem>>, vector<8x1xf32>
      %79 = arith.subf %77, %78 : vector<8x1xf32>
      %c0_44 = arith.constant 0 : index
      %c0_45 = arith.constant 0 : index
      %80 = vector.load %arg6[%c0_44, %c0_45] : memref<8x1xf32, #tpu.memory_space<vmem>>, vector<8x1xf32>
      tpu.vector_store %arg6[%c0_44, %c0_45], %79 {strides = array<i32>} : memref<8x1xf32, #tpu.memory_space<vmem>>, vector<8x1xf32>,
    } else {
    }
    return
  }
  func.func @transform_0(%arg0: i32, %arg1: i32) -> (i32, i32) {
    %c0_i32 = arith.constant 0 : i32
    %c0_i32_0 = arith.constant 0 : i32
    return %arg0, %c0_i32 : i32, i32
  }
  func.func @transform_1(%arg0: i32, %arg1: i32) -> (i32, i32) {
    %c0_i32 = arith.constant 0 : i32
    %c0_i32_0 = arith.constant 0 : i32
    return %c0_i32, %arg1 : i32, i32
  }
  func.func @transform_2(%arg0: i32, %arg1: i32) -> (i32, i32) {
    %c0_i32 = arith.constant 0 : i32
    %c0_i32_0 = arith.constant 0 : i32
    return %c0_i32, %arg1 : i32, i32
  }
  func.func @transform_3(%arg0: i32, %arg1: i32) -> (i32, i32) {
    %c0_i32 = arith.constant 0 : i32
    %c0_i32_0 = arith.constant 0 : i32
    return %arg0, %c0_i32 : i32, i32
  }
  func.func @transform_4(%arg0: i32, %arg1: i32) -> (i32, i32) {
    %c0_i32 = arith.constant 0 : i32
    %c0_i32_0 = arith.constant 0 : i32
    return %arg0, %c0_i32 : i32, i32
  }
}

</mosaic_0001>

<llo_original>
// kernel: tpu_custom_call.1
$region0: #{tpu_custom_call.1}
  #allocation0 [shape = 'u32[]', space=smem, size = 0x4, offset = 0x4, fixed_abs, tag = 'smem constant byte address 0x4 - core index']
  #allocation1 [shape = 'u32[144,128]{1,0:T(1,128)}', space=vmem, size = 0x12000, scoped, tag = 'internal scratch']
  #allocation2 [shape = 'f32[8,1]{1,0:T(8,128)}', space=vmem, size = 0x1000, scoped, tag = 'scratch operand']
  #allocation3 [shape = 'f32[8,1]{1,0:T(8,128)}', space=vmem, size = 0x1000, scoped, tag = 'scratch operand']
  #allocation4 [shape = 'f32[8,1]{1,0:T(8,128)}', space=vmem, size = 0x1000, scoped, tag = 'scratch operand']
  %s0 = inlined_call_operand.vmem [shape: f32[8,128], index: 0, kind: input, shape index: {}]
  %s1 = inlined_call_operand.hbm [shape: f32[128,128], index: 1, kind: input, shape index: {}]
  %s2 = inlined_call_operand.vmem [shape: f32[1,128], index: 2, kind: input, shape index: {}]
  %s3 = inlined_call_operand.vmem [shape: s32[8,1], index: 3, kind: input, shape index: {}]
  %s4 = inlined_call_operand.vmem [shape: f32[8,1], index: 4, kind: output, shape index: {}]
  %s5 = sld [smem:[#allocation0]]
  $region38: #{tpu_custom_call.1} parent=0
    _
  %s7 = ssub.s32 1, %s5
  %s8 = scalar_select 0, %s7, %s5
  $region1: #{tpu_custom_call.1} parent=0
    #allocation5 [shape = 'u8[65536]{0}', space=vmem, size = 0x10000, scoped, tag = 'input window, operand 1, single buffered']
    #allocation6 [shape = 's32[1]{0}', space=sflag, size = 0x4, scoped, tag = 'scoped memory for tpu_custom_call.1']
    %9 = vsyncpa [#allocation6], 0
    // Predicated region
    $region2: #{tpu_custom_call.1} parent=1 // pred_check
      _
    $region3: #{tpu_custom_call.1} parent=1 // pred_check_branch
      %11 = sbr.rel (0) target = $region5
    $region4: #{tpu_custom_call.1} parent=1 // pred_region
      _
    $region5: #{tpu_custom_call.1} parent=1 // pred_fallthru
      _
    // Predicated region
    $region6: #{tpu_custom_call.1} parent=1 // pred_check
      _
    $region7: #{tpu_custom_call.1} parent=1 // pred_check_branch
      %13 = sbr.rel (0) target = $region9
    $region8: #{tpu_custom_call.1} parent=1 // pred_region
      %s15 = ssub.s32 2048, 2048
      %16 = vsyncadd [#allocation6], %s15
      %s17 = sshll.u32 [#allocation5], 4
      %s18 = int_to_ptr.vmem [resolvable:$true] %s17
      %23 = dma.hbm_to_vmem [thread:$0]  %s1, 2048, %s18, [#allocation6], 128, 128, 8
    $region9: #{tpu_custom_call.1} parent=1 // pred_fallthru
      _
    // Predicated region
    $region10: #{tpu_custom_call.1} parent=1 // pred_check
      _
    $region11: #{tpu_custom_call.1} parent=1 // pred_check_branch
      %25 = sbr.rel (0) target = $region13
    $region12: #{tpu_custom_call.1} parent=1 // pred_region
      _
    $region13: #{tpu_custom_call.1} parent=1 // pred_fallthru
      _
    // Predicated region
    $region14: #{tpu_custom_call.1} parent=1 // pred_check
      _
    $region15: #{tpu_custom_call.1} parent=1 // pred_check_branch
      %27 = sbr.rel (0) target = $region17
    $region16: #{tpu_custom_call.1} parent=1 // pred_region
      _
    $region17: #{tpu_custom_call.1} parent=1 // pred_fallthru
      _
    // Predicated region
    $region18: #{tpu_custom_call.1} parent=1 // pred_check
      _
    $region19: #{tpu_custom_call.1} parent=1 // pred_check_branch
      %29 = sbr.rel (0) target = $region21
    $region20: #{tpu_custom_call.1} parent=1 // pred_region
      %30 = dma.done [#allocation6], 2048
    $region21: #{tpu_custom_call.1} parent=1 // pred_fallthru
      _
    %p31 = scmp.eq.s32.totalorder 0, 0
    // Predicated region
    $region22: #{tpu_custom_call.1} parent=1 // pred_check
      %p32 = pneg %p31
    $region23: #{tpu_custom_call.1} parent=1 // pred_check_branch
      %34 = sbr.rel (%p32) target = $region25
    $region24: #{tpu_custom_call.1} parent=1 // pred_region
      %vm35 = vcmask 7168
      %36 = vst.msk [vmem:[#allocation2] sm:$0xff] %vm35, -1e+30
      %37 = vst.msk [vmem:[#allocation3] sm:$0xff] %vm35, 0.0
      %38 = vst.msk [vmem:[#allocation4] sm:$0xff] %vm35, 0.0
    $region25: #{tpu_custom_call.1} parent=1 // pred_fallthru
      _
    %v39 = vld [vmem:[%s0] sm:$0xff]
    %v40 = vld [vmem:[#allocation5] sm:$0xff]
    %v41 = vld [vmem:[#allocation5 + $0x8] sm:$0xff]
    %v42 = vld [vmem:[#allocation5 + $0x10] sm:$0xff]
    %v43 = vld [vmem:[#allocation5 + $0x18] sm:$0xff]
    %v44 = vld [vmem:[#allocation5 + $0x20] sm:$0xff]
    %v45 = vld [vmem:[#allocation5 + $0x28] sm:$0xff]
    %v46 = vld [vmem:[#allocation5 + $0x30] sm:$0xff]
    %v47 = vld [vmem:[#allocation5 + $0x38] sm:$0xff]
    %v48 = vld [vmem:[#allocation5 + $0x40] sm:$0xff]
    %v49 = vld [vmem:[#allocation5 + $0x48] sm:$0xff]
    %v50 = vld [vmem:[#allocation5 + $0x50] sm:$0xff]
    %v51 = vld [vmem:[#allocation5 + $0x58] sm:$0xff]
    %v52 = vld [vmem:[#allocation5 + $0x60] sm:$0xff]
    %v53 = vld [vmem:[#allocation5 + $0x68] sm:$0xff]
    %v54 = vld [vmem:[#allocation5 + $0x70] sm:$0xff]
    %v55 = vld [vmem:[#allocation5 + $0x78] sm:$0xff]
    %56 = vmatprep.subr.mxu0 0.0
    %57 = vmatpush1.msra.mxu0 %v40
    %58 = vmatprep.subr.mxu0 0.0
    %59 = vmatpush1.msra.mxu0 %v41
    %60 = vmatprep.subr.mxu0 0.0
    %61 = vmatpush1.msra.mxu0 %v42
    %62 = vmatprep.subr.mxu0 0.0
    %63 = vmatpush1.msra.mxu0 %v43
    %64 = vmatprep.subr.mxu0 0.0
    %65 = vmatpush1.msra.mxu0 %v44
    %66 = vmatprep.subr.mxu0 0.0
    %67 = vmatpush1.msra.mxu0 %v45
    %68 = vmatprep.subr.mxu0 0.0
    %69 = vmatpush1.msra.mxu0 %v46
    %70 = vmatprep.subr.mxu0 0.0
    %71 = vmatpush1.msra.mxu0 %v47
    %72 = vmatprep.subr.mxu0 0.0
    %73 = vmatpush1.msra.mxu0 %v48
    %74 = vmatprep.subr.mxu0 0.0
    %75 = vmatpush1.msra.mxu0 %v49
    %76 = vmatprep.subr.mxu0 0.0
    %77 = vmatpush1.msra.mxu0 %v50
    %78 = vmatprep.subr.mxu0 0.0
    %79 = vmatpush1.msra.mxu0 %v51
    %80 = vmatprep.subr.mxu0 0.0
    %81 = vmatpush1.msra.mxu0 %v52
    %82 = vmatprep.subr.mxu0 0.0
    %83 = vmatpush1.msra.mxu0 %v53
    %84 = vmatprep.subr.mxu0 0.0
    %85 = vmatpush1.msra.mxu0 %v54
    %86 = vmatprep.subr.mxu0 0.0
    %87 = vmatpush1.msra.mxu0 %v55
    %88 = vmatprep.subr.mxu0 0.0
    %89 = vmatpush1.msra.mxu0 0.0
    %90 = vmatprep.subr.mxu0 0.0
    %91 = vmatpush1.msra.mxu0 0.0
    %92 = vmatprep.subr.mxu0 0.0
    %93 = vmatpush1.msra.mxu0 0.0
    %94 = vmatprep.subr.mxu0 0.0
    %95 = vmatpush1.msra.mxu0 0.0
    %96 = vmatprep.subr.mxu0 0.0
    %97 = vmatpush1.msra.mxu0 0.0
    %98 = vmatprep.subr.mxu0 0.0
    %99 = vmatpush1.msra.mxu0 0.0
    %100 = vmatprep.subr.mxu0 0.0
    %101 = vmatpush1.msra.mxu0 0.0
    %102 = vmatprep.subr.mxu0 0.0
    %103 = vmatpush1.msra.mxu0 0.0
    %104 = vmatprep.subr.mxu0 0.0
    %105 = vmatpush1.msra.mxu0 0.0
    %106 = vmatprep.subr.mxu0 0.0
    %107 = vmatpush1.msra.mxu0 0.0
    %108 = vmatprep.subr.mxu0 0.0
    %109 = vmatpush1.msra.mxu0 0.0
    %110 = vmatprep.subr.mxu0 0.0
    %111 = vmatpush1.msra.mxu0 0.0
    %112 = vmatprep.subr.mxu0 0.0
    %113 = vmatpush1.msra.mxu0 0.0
    %114 = vmatprep.subr.mxu0 0.0
    %115 = vmatpush1.msra.mxu0 0.0
    %116 = vmatprep.subr.mxu0 0.0
    %117 = vmatpush1.msra.mxu0 0.0
    %118 = vmatprep.subr.mxu0 0.0
    %119 = vmatpush1.msra.mxu0 0.0
    %120 = vmatprep.mubr.f32.mxu0 0.0
    %121 = vmatmul.mubr.f32.gmra.mrb[0].mxu0 %v39
    %v122 = vpop.f32.mrb[0].mxu0
    %v123 = vadd.f32 0.0, %v122
    %v124 = vpop.f32.mrb[0].mxu0
    %125 = vdwg.mxu0
    %v126 = vld [vmem:[%s3] sm:$0xff]
    %s127 = smul.u32 0, 128
    %v128 = vstv %s127
    %v129 = vsub.s32 %v126, %v128
    %v130 = vlaneseq
    %v131 = vand.u32 %v130, 127
    %132 = vset.pattern.permute.xlu0 0
    %133 = vperm.xlu0 %132, %v129
    %v134 = vpop.permute.xlu0 %133
    %vm135 = vcmp.eq.s32.totalorder %v131, %v134
    %v136 = vsel %vm135, %v123, 0.0
    %137 = vadd.xlane.f32.xlu0 %v136
    %v138 = vpop.xlane.xlu0 %137
    %v139 = vmul.f32 %v138, 0.015625
    %v140 = vmul.f32 %v139, %v139
    %v141 = vsub.f32 1.0, %v140
    %v142 = vmax.f32 %v141, 0.0
    %v143 = vmin.f32 %v142, 1.0
    %v144 = vrsqrt.pop %v143
    %v145 = vmul.f32 %v143, %v144
    %vm146 = vcmp.eq.f32.partialorder %v143, inf
    %v147 = vsel %vm146, %v143, %v145
    %vm148 = vcmp.eq.f32.partialorder %v143, 0.0
    %v149 = vand.u32 %v143, 2147483648
    %v150 = vsel %vm148, %v149, %v147
    %v151 = vmul.f32 %v139, 0.87758255
    %v152 = vmul.f32 %v150, 0.47942555
    %v153 = vsub.f32 %v151, %v152
    %vm154 = vcmp.gt.f32.partialorder %v139, -0.87758255
    %v155 = vsub.f32 %v139, 0.23971277
    %v156 = vsel %vm154, %v153, %v155
    %v157 = vmul.f32 %v156, 64.0
    %vm158 = vcmp.ge.s32.totalorder %v129, 0
    %vm159 = vcmp.lt.s32.totalorder %v129, 128
    %vm160 = vmand %vm158, %vm159
    %v161 = vld [vmem:[#allocation4] sm:$0xff]
    %v162 = vsel %vm160, %v157, 0.0
    %v163 = vadd.f32 %v161, %v162
    %vm164 = vcmask 7168
    %165 = vst.msk [vmem:[#allocation4] sm:$0xff] %vm164, %v163
    %v166 = vsel %vm135, %v157, %v123
    %v167 = vld [vmem:[%s2] sm:$0x1]
    %v169 = vlaneseq
    %v170 = vshrl.u32 %v169, 7
    %v171 = vsub.s32 0, %v170
    %v172 = vrot.slane %v167, %v171
    %v174 = vadd.f32 %v166, %v172
    %v175 = vld [vmem:[#allocation2] sm:$0xff]
    %176 = vmax.xlane.f32.xlu0 %v174
    %v177 = vpop.xlane.xlu0 %176
    %v178 = vmax.f32 %v175, %v177
    %v179 = vsub.f32 %v175, %v178
    %v180 = vmul.f32 %v179, 1.442695
    %v181 = vpow.pop %v180
    %v182 = vld [vmem:[#allocation3] sm:$0xff]
    %v183 = vmul.f32 %v181, %v182
    %185 = vset.pattern.permute.xlu0 0
    %186 = vperm.xlu0 %185, %v178
    %v187 = vpop.permute.xlu0 %186
    %v189 = vsub.f32 %v174, %v187
    %v190 = vmul.f32 %v189, 1.442695
    %v191 = vpow.pop %v190
    %192 = vadd.xlane.f32.xlu0 %v191
    %v193 = vpop.xlane.xlu0 %192
    %v194 = vadd.f32 %v183, %v193
    %195 = vst.msk [vmem:[#allocation3] sm:$0xff] %vm164, %v194
    %196 = vst.msk [vmem:[#allocation2] sm:$0xff] %vm164, %v178
    // Predicated region
    $region26: #{tpu_custom_call.1} parent=1 // pred_check
      %p197 = pneg %p31
    $region27: #{tpu_custom_call.1} parent=1 // pred_check_branch
      %199 = sbr.rel (%p197) target = $region29
    $region28: #{tpu_custom_call.1} parent=1 // pred_region
      %v200 = vld [vmem:[#allocation2] sm:$0xff]
      %v201 = vld [vmem:[#allocation3] sm:$0xff]
      %v202 = vlog2.pop %v201
      %v203 = vmul.f32 %v202, 0.6931472
      %v204 = vadd.f32 %v200, %v203
      %v205 = vld [vmem:[#allocation4] sm:$0xff]
      %v206 = vsub.f32 %v204, %v205
      %207 = vst.msk [vmem:[%s4] sm:$0xff] %vm164, %v206
    $region29: #{tpu_custom_call.1} parent=1 // pred_fallthru
      _
    // Predicated region
    $region30: #{tpu_custom_call.1} parent=1 // pred_check
      _
    $region31: #{tpu_custom_call.1} parent=1 // pred_check_branch
      %209 = sbr.rel (0) target = $region33
    $region32: #{tpu_custom_call.1} parent=1 // pred_region
      _
    $region33: #{tpu_custom_call.1} parent=1 // pred_fallthru
      _
    // Predicated region
    $region34: #{tpu_custom_call.1} parent=1 // pred_check
      _
    $region35: #{tpu_custom_call.1} parent=1 // pred_check_branch
      %211 = sbr.rel (0) target = $region37
    $region36: #{tpu_custom_call.1} parent=1 // pred_region
      _
    $region37: #{tpu_custom_call.1} parent=1 // pred_fallthru
      _
    %212 = vsyncpa [#allocation6], 1

</llo_original>
